<compile_context>
chip_gen: v7x
topology: tpu7x:2x2x1
jax: 0.10.0
libtpu: 0.0.40
codegen_flags: <defaults>
</compile_context>

<pallas_src>
import jax
import jax.numpy as jnp
from jax.experimental import pallas as pl
from jax.experimental.pallas import tpu as pltpu

_MAX_TILE_ROWS = 8192                 # VMEM-derived ceiling (see header math)
_VMEM_LIMIT_BYTES = 32 * 1024 * 1024  # safe on v5e/v6e/v7x


def _round_up(x: int, m: int) -> int:
    return ((x + m - 1) // m) * m


def _make_kernel(batch: int, d: int, alpha: float, beta: float):
    inv_b = 1.0 / float(batch)
    alpha = float(alpha)
    beta = float(beta)

    def kernel(pred_ref, true_ref, out_ref):
        """pred_ref/true_ref: (tile_b, d) VMEM blocks of the (B, D) inputs.

        out_ref: (3,) f32 SMEM, resident across the grid:
          out_ref[0] = pose_loss, out_ref[1] = location_loss,
          out_ref[2] = orientation_loss.
        """
        step = pl.program_id(0)

        @pl.when(step == 0)
        def _init():
            out_ref[0] = jnp.float32(0.0)
            out_ref[1] = jnp.float32(0.0)
            out_ref[2] = jnp.float32(0.0)

        # In-kernel upcast (keeps bf16 inputs narrow in HBM / VMEM).
        pred = pred_ref[...].astype(jnp.float32)
        true = true_ref[...].astype(jnp.float32)
        diff = pred - true                    # (tile_b, d) f32
        sq = diff * diff                      # computed once, reused

        tile_rows = diff.shape[0]
        # Row-validity mask: handles the ragged last block of a multi-step
        # grid (OOB rows are garbage); all-true for the single-step case.
        row = jax.lax.broadcasted_iota(jnp.int32, (tile_rows, 1), 0)
        valid = (step * tile_rows + row) < batch          # (tile_b, 1) bool

        # Location: direct masked sum over the front columns (no cancellation).
        loc_sq = jnp.where(valid, sq[:, : d - 1], 0.0)
        # Orientation: cos only on the last column.
        ori_diff = diff[:, d - 1 : d]
        ori_val = jnp.where(valid, 1.0 - jnp.cos(ori_diff), 0.0)

        out_ref[1] += jnp.sum(loc_sq)
        out_ref[2] += jnp.sum(ori_val)

        @pl.when(step == pl.num_programs(0) - 1)
        def _finalize():
            loc = out_ref[1] * inv_b
            ori = out_ref[2] * inv_b
            out_ref[1] = loc
            out_ref[2] = ori
            out_ref[0] = alpha * loc + beta * ori

    return kernel


def pose_loss(pred_pose: jax.Array, true_pose: jax.Array,
              alpha: float = 1.0, beta: float = 1.0, *, tile_rows: int | None = None):
    """Returns (pose_loss, meta) mirroring the PyTorch PoseLoss.forward."""
    assert pred_pose.shape == true_pose.shape
    assert pred_pose.ndim == 2
    b, d = pred_pose.shape
    assert d >= 2, "need at least one location column and one orientation column"

    # Default: one grid step whenever the batch fits the VMEM ceiling.
    if tile_rows is None:
        tile_rows = b if b <= _MAX_TILE_ROWS else _MAX_TILE_ROWS
    if tile_rows >= b:
        tile_rows = b                                   # block == full array
    else:
        tile_rows = max(8, _round_up(min(tile_rows, _MAX_TILE_ROWS), 8))
    grid = (pl.cdiv(b, tile_rows),)

    itemsize = jnp.dtype(pred_pose.dtype).itemsize
    cost = pl.CostEstimate(
        flops=3 * b * d,
        transcendentals=b,
        bytes_accessed=2 * b * d * itemsize + 3 * 4,
    )

    sums = pl.pallas_call(
        _make_kernel(b, d, alpha, beta),
        out_shape=jax.ShapeDtypeStruct((3,), jnp.float32),
        grid=grid,
        in_specs=[
            pl.BlockSpec((tile_rows, d), lambda i: (i, 0)),
            pl.BlockSpec((tile_rows, d), lambda i: (i, 0)),
        ],
        out_specs=pl.BlockSpec(memory_space=pltpu.MemorySpace.SMEM),
        compiler_params=pltpu.CompilerParams(
            dimension_semantics=("arbitrary",),
            vmem_limit_bytes=_VMEM_LIMIT_BYTES,
        ),
        cost_estimate=cost,
    )(pred_pose, true_pose)

    pose = sums[0]
    meta = {"location_loss": sums[1], "orientation_loss": sums[2]}
    return pose, meta


def _reference(pred, true, alpha, beta):
    b = pred.shape[0]
    dl = (pred[:, :-1] - true[:, :-1]).astype(jnp.float32)
    loc = jnp.sum(dl * dl) / b
    ori = jnp.mean(1.0 - jnp.cos((pred[:, -1] - true[:, -1]).astype(jnp.float32)))
    return alpha * loc + beta * ori, loc, ori


if __name__ == "__main__":
    key = jax.random.PRNGKey(0)
    k1, k2, k3, k4 = jax.random.split(key, 4)

    # Case 1: small batch, D=4 -> single grid step, block == full array.
    B1, D1 = 8, 4
    pred1 = jax.random.normal(k1, (B1, D1), dtype=jnp.float32)
    true1 = jax.random.normal(k2, (B1, D1), dtype=jnp.float32)
    pose1, meta1 = pose_loss(pred1, true1, alpha=1.0, beta=1.0)
    jax.block_until_ready(pose1)

    ref_pose1, ref_loc1, ref_ori1 = _reference(pred1, true1, 1.0, 1.0)
    assert jnp.allclose(meta1["location_loss"], ref_loc1, rtol=1e-4, atol=1e-5)
    assert jnp.allclose(meta1["orientation_loss"], ref_ori1, rtol=1e-4, atol=1e-5)
    assert jnp.allclose(pose1, ref_pose1, rtol=1e-4, atol=1e-5)

    # Case 2: non-multiple-of-tile batch, D=7, forced small tile to exercise
    # the multi-step accumulating grid, ragged-tail mask and alpha/beta.
    B2, D2 = 520, 7
    pred2 = jax.random.normal(k3, (B2, D2), dtype=jnp.float32)
    true2 = jax.random.normal(k4, (B2, D2), dtype=jnp.float32)
    pose2, meta2 = pose_loss(pred2, true2, alpha=0.7, beta=1.3, tile_rows=256)
    jax.block_until_ready(pose2)
    jax.block_until_ready(meta2["location_loss"])
    jax.block_until_ready(meta2["orientation_loss"])

    ref_pose2, ref_loc2, ref_ori2 = _reference(pred2, true2, 0.7, 1.3)
    assert jnp.allclose(meta2["location_loss"], ref_loc2, rtol=1e-4, atol=1e-5)
    assert jnp.allclose(meta2["orientation_loss"], ref_ori2, rtol=1e-4, atol=1e-5)
    assert jnp.allclose(pose2, ref_pose2, rtol=1e-4, atol=1e-5)

    print("KERNEL_OK")
</pallas_src>

<mosaic_0001>
module attributes {stable_mosaic.version = 11 : i64} {
  func.func @kernel(%arg0: i32, %arg1: memref<8x4xf32, #tpu.memory_space<vmem>>, %arg2: memref<8x4xf32, #tpu.memory_space<vmem>>, %arg3: memref<3xf32, #tpu.memory_space<smem>>) attributes {dimension_semantics = [#tpu.dimension_semantics<arbitrary>], iteration_bounds = array<i64: 1>, scalar_prefetch = 0 : i64, scratch_operands = 0 : i64, tpu.core_type = #tpu.core_type<tc>, window_params = [{transform_indices = @transform_0, window_bounds = array<i64: 8, 4>}, {transform_indices = @transform_1, window_bounds = array<i64: 8, 4>}, {transform_indices = @transform_2, window_bounds = array<i64: 3>}]} {
    %c0_i32 = arith.constant 0 : i32
    %0 = arith.cmpi eq, %arg0, %c0_i32 : i32
    %1 = arith.extui %0 : i1 to i32
    %c0_i32_0 = arith.constant 0 : i32
    %2 = arith.cmpi ne, %1, %c0_i32_0 : i32
    scf.if %2 {
      %cst_13 = arith.constant 0.000000e+00 : f32
      %c0_14 = arith.constant 0 : index
      %41 = memref.load %arg3[%c0_14] : memref<3xf32, #tpu.memory_space<smem>>
      memref.store %cst_13, %arg3[%c0_14] : memref<3xf32, #tpu.memory_space<smem>>
      %cst_15 = arith.constant 0.000000e+00 : f32
      %c1_16 = arith.constant 1 : index
      %42 = memref.load %arg3[%c1_16] : memref<3xf32, #tpu.memory_space<smem>>
      memref.store %cst_15, %arg3[%c1_16] : memref<3xf32, #tpu.memory_space<smem>>
      %cst_17 = arith.constant 0.000000e+00 : f32
      %c2_18 = arith.constant 2 : index
      %43 = memref.load %arg3[%c2_18] : memref<3xf32, #tpu.memory_space<smem>>
      memref.store %cst_17, %arg3[%c2_18] : memref<3xf32, #tpu.memory_space<smem>>
    } else {
    }
    %c0 = arith.constant 0 : index
    %c0_1 = arith.constant 0 : index
    %3 = vector.load %arg1[%c0, %c0_1] : memref<8x4xf32, #tpu.memory_space<vmem>>, vector<8x4xf32>
    %c0_2 = arith.constant 0 : index
    %c0_3 = arith.constant 0 : index
    %4 = vector.load %arg2[%c0_2, %c0_3] : memref<8x4xf32, #tpu.memory_space<vmem>>, vector<8x4xf32>
    %5 = arith.subf %3, %4 : vector<8x4xf32>
    %6 = arith.mulf %5, %5 : vector<8x4xf32>
    %7 = tpu.iota {dimensions = array<i32: 0>} : vector<8x1xi32>
    %c8_i32 = arith.constant 8 : i32
    %8 = arith.muli %arg0, %c8_i32 : i32
    %9 = vector.broadcast %8 : i32 to vector<8x1xi32>
    %10 = arith.addi %9, %7 : vector<8x1xi32>
    %c8_i32_4 = arith.constant 8 : i32
    %11 = vector.broadcast %c8_i32_4 : i32 to vector<8x1xi32>
    %12 = arith.cmpi slt, %10, %11 : vector<8x1xi32>
    %13 = vector.extract_strided_slice %6 {offsets = [0, 0], sizes = [8, 3], strides = [1, 1]} : vector<8x4xf32> to vector<8x3xf32>
    %cst = arith.constant 0.000000e+00 : f32
    %14 = vector.shape_cast %12 : vector<8x1xi1> to vector<8x1xi1>
    %15 = vector.broadcast %14 : vector<8x1xi1> to vector<8x3xi1>
    %16 = vector.broadcast %cst : f32 to vector<8x3xf32>
    %17 = arith.select %15, %13, %16 : vector<8x3xi1>, vector<8x3xf32>
    %18 = vector.extract_strided_slice %5 {offsets = [0, 3], sizes = [8, 1], strides = [1, 1]} : vector<8x4xf32> to vector<8x1xf32>
    %19 = math.cos %18 : vector<8x1xf32>
    %cst_5 = arith.constant 1.000000e+00 : f32
    %20 = vector.broadcast %cst_5 : f32 to vector<8x1xf32>
    %21 = arith.subf %20, %19 : vector<8x1xf32>
    %cst_6 = arith.constant 0.000000e+00 : f32
    %22 = vector.broadcast %cst_6 : f32 to vector<8x1xf32>
    %23 = arith.select %12, %21, %22 : vector<8x1xi1>, vector<8x1xf32>
    %c1 = arith.constant 1 : index
    %24 = memref.load %arg3[%c1] : memref<3xf32, #tpu.memory_space<smem>>
    %25 = vector.shape_cast %17 : vector<8x3xf32> to vector<1x8x3xf32>
    %cst_7 = arith.constant dense<0.000000e+00> : vector<1xf32>
    %26 = vector.multi_reduction <add>, %25, %cst_7 [1, 2] : vector<1x8x3xf32> to vector<1xf32>
    %27 = vector.shape_cast %26 : vector<1xf32> to vector<1x1x1xf32>
    %28 = vector.extract %27[0, 0, 0] : f32 from vector<1x1x1xf32>
    %29 = arith.addf %24, %28 : f32
    %c1_8 = arith.constant 1 : index
    %30 = memref.load %arg3[%c1_8] : memref<3xf32, #tpu.memory_space<smem>>
    memref.store %29, %arg3[%c1_8] : memref<3xf32, #tpu.memory_space<smem>>
    %c2 = arith.constant 2 : index
    %31 = memref.load %arg3[%c2] : memref<3xf32, #tpu.memory_space<smem>>
    %32 = vector.shape_cast %23 : vector<8x1xf32> to vector<1x8x1xf32>
    %cst_9 = arith.constant dense<0.000000e+00> : vector<1xf32>
    %33 = vector.multi_reduction <add>, %32, %cst_9 [1, 2] : vector<1x8x1xf32> to vector<1xf32>
    %34 = vector.shape_cast %33 : vector<1xf32> to vector<1x1x1xf32>
    %35 = vector.extract %34[0, 0, 0] : f32 from vector<1x1x1xf32>
    %36 = arith.addf %31, %35 : f32
    %c2_10 = arith.constant 2 : index
    %37 = memref.load %arg3[%c2_10] : memref<3xf32, #tpu.memory_space<smem>>
    memref.store %36, %arg3[%c2_10] : memref<3xf32, #tpu.memory_space<smem>>
    %c0_i32_11 = arith.constant 0 : i32
    %38 = arith.cmpi eq, %arg0, %c0_i32_11 : i32
    %39 = arith.extui %38 : i1 to i32
    %c0_i32_12 = arith.constant 0 : i32
    %40 = arith.cmpi ne, %39, %c0_i32_12 : i32
    scf.if %40 {
      %c1_13 = arith.constant 1 : index
      %41 = memref.load %arg3[%c1_13] : memref<3xf32, #tpu.memory_space<smem>>
      %cst_14 = arith.constant 1.250000e-01 : f32
      %42 = arith.mulf %41, %cst_14 : f32
      %c2_15 = arith.constant 2 : index
      %43 = memref.load %arg3[%c2_15] : memref<3xf32, #tpu.memory_space<smem>>
      %cst_16 = arith.constant 1.250000e-01 : f32
      %44 = arith.mulf %43, %cst_16 : f32
      %c1_17 = arith.constant 1 : index
      %45 = memref.load %arg3[%c1_17] : memref<3xf32, #tpu.memory_space<smem>>
      memref.store %42, %arg3[%c1_17] : memref<3xf32, #tpu.memory_space<smem>>
      %c2_18 = arith.constant 2 : index
      %46 = memref.load %arg3[%c2_18] : memref<3xf32, #tpu.memory_space<smem>>
      memref.store %44, %arg3[%c2_18] : memref<3xf32, #tpu.memory_space<smem>>
      %cst_19 = arith.constant 1.000000e+00 : f32
      %47 = arith.mulf %cst_19, %42 : f32
      %cst_20 = arith.constant 1.000000e+00 : f32
      %48 = arith.mulf %cst_20, %44 : f32
      %49 = arith.addf %47, %48 : f32
      %c0_21 = arith.constant 0 : index
      %50 = memref.load %arg3[%c0_21] : memref<3xf32, #tpu.memory_space<smem>>
      memref.store %49, %arg3[%c0_21] : memref<3xf32, #tpu.memory_space<smem>>
    } else {
    }
    return
  }
  func.func @transform_0(%arg0: i32) -> (i32, i32) {
    %c0_i32 = arith.constant 0 : i32
    %c0_i32_0 = arith.constant 0 : i32
    return %arg0, %c0_i32 : i32, i32
  }
  func.func @transform_1(%arg0: i32) -> (i32, i32) {
    %c0_i32 = arith.constant 0 : i32
    %c0_i32_0 = arith.constant 0 : i32
    return %arg0, %c0_i32 : i32, i32
  }
  func.func @transform_2(%arg0: i32) -> i32 {
    %c0_i32 = arith.constant 0 : i32
    %c0_i32_0 = arith.constant 0 : i32
    return %c0_i32 : i32
  }
}

</mosaic_0001>

<llo_original>
// kernel: tpu_custom_call.1
$region0: #{tpu_custom_call.1}
  #allocation0 [shape = 'u32[]', space=smem, size = 0x4, offset = 0x4, fixed_abs, tag = 'smem constant byte address 0x4 - core index']
  #allocation1 [shape = 'u32[144,128]{1,0:T(1,128)}', space=vmem, size = 0x12000, scoped, tag = 'internal scratch']
  %s0 = inlined_call_operand.vmem [shape: f32[8,4], index: 0, kind: input, shape index: {}]
  %s1 = inlined_call_operand.vmem [shape: f32[8,4], index: 1, kind: input, shape index: {}]
  %s2 = inlined_call_operand.hbm [shape: f32[3], index: 2, kind: output, shape index: {}]
  %s3 = sld [smem:[#allocation0]]
  $region26: #{tpu_custom_call.1} parent=0
    _
  %s5 = ssub.s32 1, %s3
  %s6 = scalar_select 0, %s5, %s3
  $region1: #{tpu_custom_call.1} parent=0
    #allocation2 [shape = 'u8[512]{0}', space=smem, size = 0x200, scoped, tag = 'output window, operand 0, single buffered']
    #allocation3 [shape = 's32[1]{0}', space=sflag, size = 0x4, scoped, tag = 'scoped memory for tpu_custom_call.1']
    %7 = vsyncpa [#allocation3], 0
    // Predicated region
    $region2: #{tpu_custom_call.1} parent=1 // pred_check
      _
    $region3: #{tpu_custom_call.1} parent=1 // pred_check_branch
      %9 = sbr.rel (0) target = $region5
    $region4: #{tpu_custom_call.1} parent=1 // pred_region
      _
    $region5: #{tpu_custom_call.1} parent=1 // pred_fallthru
      _
    // Predicated region
    $region6: #{tpu_custom_call.1} parent=1 // pred_check
      _
    $region7: #{tpu_custom_call.1} parent=1 // pred_check_branch
      %11 = sbr.rel (0) target = $region9
    $region8: #{tpu_custom_call.1} parent=1 // pred_region
      _
    $region9: #{tpu_custom_call.1} parent=1 // pred_fallthru
      _
    %p12 = scmp.eq.s32.totalorder 0, 0
    // Predicated region
    $region10: #{tpu_custom_call.1} parent=1 // pred_check
      %p13 = pneg %p12
    $region11: #{tpu_custom_call.1} parent=1 // pred_check_branch
      %15 = sbr.rel (%p13) target = $region13
    $region12: #{tpu_custom_call.1} parent=1 // pred_region
      %s16 = scalar_lea.smem [#allocation2], 0
      %17 = sst [smem:[%s16]] 0.0
      %s18 = scalar_lea.smem [#allocation2], 1
      %19 = sst [smem:[%s18]] 0.0
      %s20 = scalar_lea.smem [#allocation2], 2
      %21 = sst [smem:[%s20]] 0.0
    $region13: #{tpu_custom_call.1} parent=1 // pred_fallthru
      _
    %v22 = vld [vmem:[%s0] sm:$0xff]
    %v23 = vld [vmem:[%s1] sm:$0xff]
    %v24 = vsub.f32 %v22, %v23
    %v25 = vmul.f32 %v24, %v24
    %v26 = vlaneseq
    %v27 = vshrl.u32 %v26, 7
    %s28 = smul.u32 0, 8
    %v29 = vstv %s28
    %v30 = vadd.s32 %v29, %v27
    %vm31 = vcmp.lt.s32.totalorder %v30, 8
    %v32 = vsel %vm31, 1, 0
    %vm33 = vcmp.eq.s32.totalorder %v32, 1
    %v34 = vsel %vm33, %v25, 0.0
    %v35 = vand.u32 2147483647, %v24
    %vm36 = vcmp.le.f32.partialorder %v35, 0.7853982
    %vm37 = vcmp.lt.s32.totalorder %v24, 0
    %v38 = vand.u32 %v24, 2139095040
    %v39 = vshrl.u32 %v38, 23
    %v40 = vsub.s32 %v39, 127
    %v41 = vand.u32 2147483647, %v24
    %v42 = vand.u32 %v41, 8388607
    %v43 = vor.u32 %v42, 8388608
    %v44 = vsub.s32 0, %v43
    %v45 = vadd.s32 %v40, 1
    %vm46 = vcmp.gt.s32.totalorder %v45, 0
    %v47 = vsel %vm46, %v45, 0
    %v48 = vshrl.u32 %v47, 5
    %v49 = vand.u32 %v47, 31
    %v50 = vsub.s32 32, %v49
    %v51 = vshrl.u32 683565275, %v50
    %v52 = vshll.u32 683565275, %v49
    %v53 = vshrl.u32 2475754826, %v50
    %v54 = vor.u32 %v52, %v53
    %v55 = vshll.u32 2475754826, %v49
    %v56 = vshrl.u32 2131351028, %v50
    %v57 = vor.u32 %v55, %v56
    %v58 = vshll.u32 2131351028, %v49
    %v59 = vshrl.u32 2102212464, %v50
    %v60 = vor.u32 %v58, %v59
    %v61 = vshll.u32 2102212464, %v49
    %v62 = vshrl.u32 920167782, %v50
    %v63 = vor.u32 %v61, %v62
    %v64 = vshll.u32 920167782, %v49
    %v65 = vshrl.u32 1326507024, %v50
    %v66 = vor.u32 %v64, %v65
    %vm67 = vcmp.lt.s32.totalorder %v48, 1
    %vm68 = vcmp.lt.s32.totalorder %v48, 2
    %vm69 = vcmp.lt.s32.totalorder %v48, 3
    %vm70 = vcmp.lt.s32.totalorder %v48, 4
    %v71 = vsel %vm67, %v51, %v54
    %v72 = vsel %vm70, %v60, 2102212464
    %v73 = vsel %vm69, %v57, %v72
    %v74 = vsel %vm68, %v71, %v73
    %v75 = vsel %vm67, %v54, %v57
    %v76 = vsel %vm70, %v63, 920167782
    %v77 = vsel %vm69, %v60, %v76
    %v78 = vsel %vm68, %v75, %v77
    %v79 = vsel %vm67, %v57, %v60
    %v80 = vsel %vm70, %v66, 1326507024
    %v81 = vsel %vm69, %v63, %v80
    %v82 = vsel %vm68, %v79, %v81
    %v83 = vshll.u32 %v43, 8
    %v84 = vmul.u32.u64.compose %v83, %v82
    %v85 = vextract.low.u32 %v84
    %v86 = vextract.high.u32 %v84
    %v87 = vmul.u32.u64.compose %v83, %v78
    %v88 = vextract.low.u32 %v87
    %v89 = vextract.high.u32 %v87
    %v90 = vmul.u32 %v83, %v74
    %v91 = vadd.s32 %v86, %v88
    %vm92 = vc.u32 %v86, %v88
    %v93 = vadd.s32 %v89, 1
    %v94 = vsel %vm92, %v93, %v89
    %v95 = vadd.s32 %v90, %v94
    %v96 = vadd.s32 %v95, 536870912
    %v97 = vshrl.u32 %v96, 30
    %v98 = vshll.u32 %v97, 30
    %v99 = vsub.s32 %v95, %v98
    %vm100 = vcmp.lt.s32.totalorder %v99, 0
    %v101 = vsub.s32 0, %v99
    %v102 = vsel %vm100, %v101, %v99
    %v103 = vclz %v102
    %v104 = vsub.s32 %v103, 2
    %vm105 = vcmp.gt.s32.totalorder 0, %v104
    %v106 = vsel %vm105, 0, %v104
    %v107 = vsub.s32 32, %v106
    %v108 = vshll.u32 %v99, %v106
    %v109 = vshrl.u32 %v91, %v107
    %v110 = vor.u32 %v108, %v109
    %v111 = vsub.s32 4294967266, %v106
    %v112 = vadd.s32 %v111, 127
    %v113 = vshll.u32 %v112, 23
    %v114 = vor.u32 4788187, %v113
    %v115 = vand.u32 2147483647, %v114
    %v117 = vcvt.s32.f32 %v110
    %v118 = vmul.f32 %v117, %v115
    %v119 = vxor.u32 %v118, 2147483648
    %v120 = vsel %vm37, %v119, %v118
    %v121 = vsub.s32 4, %v97
    %v122 = vsel %vm37, %v121, %v97
    %v123 = vsel %vm36, %v24, %v120
    %v124 = vsel %vm36, 0, %v122
    %v125 = vcosq.f32.pop %v123
    %v126 = vsinq.f32.pop %v123
    %vm127 = vweird.f32 %v24
    %v128 = vand.u32 %v124, 3
    %vm129 = vcmp.lt.s32.totalorder %v128, 2
    %vm130 = vcmp.eq.s32.totalorder %v128, 0
    %v131 = vxor.u32 %v126, 2147483648
    %v132 = vsel %vm130, %v125, %v131
    %vm133 = vcmp.eq.s32.totalorder %v128, 2
    %v134 = vxor.u32 %v125, 2147483648
    %v135 = vsel %vm133, %v134, %v126
    %v136 = vsel %vm129, %v132, %v135
    %v137 = vsel %vm127, nan, %v136
    %v138 = vsub.f32 1.0, %v137
    %v139 = vsel %vm31, %v138, 0.0
    %s140 = sld [smem:[#allocation2 + $0x1]]
    %vm141 = vcmask 23552
    %v142 = vsel %vm141, %v34, 0.0
    %143 = vadd.xlane.f32.xlu0 %v142
    %v144 = vpop.xlane.xlu0 %143
    %v145 = vrot.slane %v144, 4
    %v146 = vadd.f32 %v144, %v145
    %v147 = vrot.slane %v146, 2
    %v148 = vadd.f32 %v146, %v147
    %v149 = vrot.slane %v148, 1
    %v150 = vadd.f32 %v148, %v149
    %s151 = vtos %v150
    %s152 = sadd.f32 %s140, %s151
    %s153 = scalar_lea.smem [#allocation2], 1
    %154 = sst [smem:[%s153]] %s152
    %s155 = sld [smem:[#allocation2 + $0x2]]
    %157 = vrot.lane.b32.xlu0 %v139, 125
    %v158 = vpop.permute.xlu0 %157
    %vm160 = vcmask 7168
    %v161 = vsel %vm160, %v158, 0.0
    %162 = vadd.xlane.f32.xlu0 %v161
    %v163 = vpop.xlane.xlu0 %162
    %v164 = vrot.slane %v163, 4
    %v165 = vadd.f32 %v163, %v164
    %v166 = vrot.slane %v165, 2
    %v167 = vadd.f32 %v165, %v166
    %v168 = vrot.slane %v167, 1
    %v169 = vadd.f32 %v167, %v168
    %s170 = vtos %v169
    %s171 = sadd.f32 %s155, %s170
    %s172 = scalar_lea.smem [#allocation2], 2
    %173 = sst [smem:[%s172]] %s171
    // Predicated region
    $region14: #{tpu_custom_call.1} parent=1 // pred_check
      %p174 = pneg %p12
    $region15: #{tpu_custom_call.1} parent=1 // pred_check_branch
      %176 = sbr.rel (%p174) target = $region17
    $region16: #{tpu_custom_call.1} parent=1 // pred_region
      %s177 = sld [smem:[#allocation2 + $0x1]]
      %s178 = smul.f32 %s177, 0.125
      %s179 = sld [smem:[#allocation2 + $0x2]]
      %s180 = smul.f32 %s179, 0.125
      %181 = sst [smem:[%s153]] %s178
      %182 = sst [smem:[%s172]] %s180
      %s183 = sadd.f32 %s178, %s180
      %s184 = scalar_lea.smem [#allocation2], 0
      %185 = sst [smem:[%s184]] %s183
    $region17: #{tpu_custom_call.1} parent=1 // pred_fallthru
      _
    // Predicated region
    $region18: #{tpu_custom_call.1} parent=1 // pred_check
      _
    $region19: #{tpu_custom_call.1} parent=1 // pred_check_branch
      %187 = sbr.rel (0) target = $region21
    $region20: #{tpu_custom_call.1} parent=1 // pred_region
      %s189 = ssub.s32 16, 16
      %190 = vsyncadd [#allocation3], %s189
      %193 = dma.smem_to_hbm [#allocation2], 16, %s2, [#allocation3]
    $region21: #{tpu_custom_call.1} parent=1 // pred_fallthru
      _
    // Predicated region
    $region22: #{tpu_custom_call.1} parent=1 // pred_check
      _
    $region23: #{tpu_custom_call.1} parent=1 // pred_check_branch
      %195 = sbr.rel (0) target = $region25
    $region24: #{tpu_custom_call.1} parent=1 // pred_region
      %196 = dma.done [#allocation3], 16
    $region25: #{tpu_custom_call.1} parent=1 // pred_fallthru
      _
    %197 = sfence
    %198 = vsyncpa [#allocation3], 1

</llo_original>
